<compile_context>
chip_gen: v5e
topology: v5e:2x2
jax: 0.10.0
libtpu: 0.0.40
codegen_flags: <defaults>
</compile_context>

<pallas_src>
import jax
import jax.numpy as jnp
from jax import lax
from jax.experimental import pallas as pl
from jax.experimental.pallas import tpu as pltpu


# ----------------------------------------------------------------------------
# Kernel
# ----------------------------------------------------------------------------
def _pixel_shuffle3d_kernel(x_ref, o_ref):
    # x_ref : (r, r, td, H, W)        axes = (rh, rw, dl, h, w), one rd group
    # o_ref : (td, 1, H, r*W*r)       lane index = rh*(W*r) + w*r + rw
    r = x_ref.shape[0]
    td, H, W = x_ref.shape[2], x_ref.shape[3], x_ref.shape[4]
    Wo = W * r
    Hp = ((H + 7) // 8) * 8          # sublane-padded row count (general H)
    G = r * td                       # merged (rh, dl) groups
    M = G * Hp                       # matmul M dimension (hundreds, not 8)

    needs_split = x_ref.dtype != jnp.bfloat16

    # 0/1 width-interleave matrices ("column w -> output lane w*r+rw"),
    # generated in-registers; exactly representable in bf16.
    w_id = lax.broadcasted_iota(jnp.int32, (W, Wo), 0)
    n_id = lax.broadcasted_iota(jnp.int32, (W, Wo), 1)

    acc = None                       # (M, Wo) f32 accumulator
    for rw in range(r):              # r is tiny (2 or 3): static unroll
        xs = x_ref[:, rw].astype(jnp.float32)            # (r, td, H, W)
        if Hp != H:                  # general-H support (not hit when H%8==0)
            xs = jnp.pad(xs, ((0, 0), (0, 0), (0, Hp - H), (0, 0)))
        lhs = xs.reshape(M, W)       # free: (8,128) tiles are just renumbered

        # Exact decomposition into bf16 pieces (1 piece if input was bf16).
        p0 = lhs.astype(jnp.bfloat16)
        pieces = [p0]
        if needs_split:
            res1 = lhs - p0.astype(jnp.float32)
            p1 = res1.astype(jnp.bfloat16)
            p2 = (res1 - p1.astype(jnp.float32)).astype(jnp.bfloat16)
            pieces += [p1, p2]

        sw = (n_id == w_id * r + rw).astype(jnp.bfloat16)    # (W, Wo) 0/1
        for p in pieces:
            t = jnp.dot(p, sw, preferred_element_type=jnp.float32)  # (M, Wo)
            acc = t if acc is None else acc + t

    z = acc.reshape(G, Hp, Wo)
    if Hp != H:
        z = z[:, :H, :]
    z = z.reshape(r, td, H, Wo)                              # (rh, dl, h, wo)
    out = jnp.concatenate([z[i] for i in range(r)], axis=-1)  # (td, H, r*Wo)
    o_ref[:, 0, :, :] = out.astype(o_ref.dtype)


# ----------------------------------------------------------------------------
# Tile sizing with padded-VMEM accounting
# ----------------------------------------------------------------------------
def _round_up(x, m):
    return ((x + m - 1) // m) * m


def _vmem_capacity_bytes():
    try:
        return int(pltpu.get_tpu_info().vmem_capacity_bytes)
    except Exception:
        return 64 << 20      # v7x per-core VMEM: conservative for all gens


def _step_vmem_bytes(td, H, W, r, itemsize, npieces):
    """Conservative, lane/sublane-padded footprint of one grid step."""
    sub_mult = {1: 32, 2: 16}.get(itemsize, 8)
    lane_in = _round_up(W, 128)
    lane_wo = _round_up(W * r, 128)
    lane_out = _round_up(r * r * W, 128)
    sub_h = _round_up(H, sub_mult)
    hp = _round_up(H, 8)
    g = r * td
    in_blk = r * r * td * sub_h * lane_in * itemsize       # pipelined input
    out_blk = td * sub_h * lane_out * itemsize              # pipelined output
    xs_f32 = g * hp * lane_in * 4                           # per-rw f32 slice
    pieces = npieces * g * hp * lane_in * 2                 # bf16 pieces
    acc = g * hp * lane_wo * 4                              # f32 accumulator
    mm = g * hp * lane_wo * 4                               # live matmul result
    stage = td * hp * lane_out * 4                          # concat staging
    return 2 * (in_blk + out_blk) + xs_f32 + pieces + acc + mm + stage


def _pick_depth_tile(D, H, W, r, itemsize, npieces, budget):
    best = 1
    for t in range(1, D + 1):
        if D % t == 0 and _step_vmem_bytes(t, H, W, r, itemsize, npieces) <= budget:
            best = t
    return best


# ----------------------------------------------------------------------------
# Wrapper
# ----------------------------------------------------------------------------
def pixel_shuffle_3d(x, upscale_factor):
    """Forward pass of PixelShuffle3D.  x: (B, C, D, H, W), C % r^3 == 0."""
    r = int(upscale_factor)
    B, C, D, H, W = x.shape
    if r == 1:
        return x
    if C % (r ** 3) != 0:
        raise ValueError(f"channels {C} not divisible by upscale_factor^3={r**3}")
    c = C // (r ** 3)
    BC = B * c
    Wo = W * r

    itemsize = jnp.dtype(x.dtype).itemsize
    npieces = 1 if jnp.dtype(x.dtype) == jnp.dtype(jnp.bfloat16) else 3

    phys_vmem = _vmem_capacity_bytes()
    budget = int(0.40 * phys_vmem)
    td = _pick_depth_tile(D, H, W, r, itemsize, npieces, budget)
    vmem_limit = int(0.85 * phys_vmem)

    # Free (contiguous) channel split: (B, C, D, H, W) -> (BC, rd, rh, rw, D, H, W)
    x7 = x.reshape(BC, r, r, r, D, H, W)

    grid = (BC, D // td, r)   # (batch*channel group, depth block, rd)

    out5 = pl.pallas_call(
        _pixel_shuffle3d_kernel,
        out_shape=jax.ShapeDtypeStruct((BC, D, r, H, r * Wo), x.dtype),
        grid_spec=pltpu.PrefetchScalarGridSpec(
            num_scalar_prefetch=0,
            grid=grid,
            in_specs=[
                pl.BlockSpec((None, None, r, r, td, H, W),
                             lambda bc, db, rd: (bc, rd, 0, 0, db, 0, 0)),
            ],
            out_specs=pl.BlockSpec((None, td, 1, H, r * Wo),
                                   lambda bc, db, rd: (bc, db, rd, 0, 0)),
        ),
        compiler_params=pltpu.CompilerParams(
            dimension_semantics=("parallel", "parallel", "parallel"),
            vmem_limit_bytes=vmem_limit),
    )(x7)

    # Free (contiguous) reshape back: (BC, D, r, H, r*W*r) == (B, c, D*r, H*r, W*r)
    return out5.reshape(B, c, D * r, H * r, W * r)


# ----------------------------------------------------------------------------
# Self-test
# ----------------------------------------------------------------------------
def _reference(x, r):
    B, C, D, H, W = x.shape
    c = C // r ** 3
    ref = x.reshape(B, c, r, r, r, D, H, W)
    ref = jnp.transpose(ref, (0, 1, 5, 2, 6, 3, 7, 4))
    return ref.reshape(B, c, D * r, H * r, W * r)


if __name__ == "__main__":
    key = jax.random.PRNGKey(0)
    r = 2
    B, c_out = 2, 2
    C = c_out * r ** 3                      # 16 input channels
    D = H = W = 8
    x = jax.random.normal(key, (B, C, D, H, W), dtype=jnp.float32)

    # float32 path (3-pass exact bf16 split on the MXU)
    out = jax.block_until_ready(pixel_shuffle_3d(x, r))
    ref = _reference(x, r)
    assert out.shape == (B, c_out, D * r, H * r, W * r)
    assert jnp.allclose(out, ref, atol=1e-6, rtol=1e-6)

    # bfloat16 path (single-pass MXU, exact pure relayout)
    xb = x.astype(jnp.bfloat16)
    outb = jax.block_until_ready(pixel_shuffle_3d(xb, r))
    refb = ref.astype(jnp.bfloat16)         # permute commutes with the cast
    assert bool(jnp.all(outb == refb))

    print("KERNEL_OK")
</pallas_src>

<mosaic_0001>
module attributes {stable_mosaic.version = 11 : i64} {
  func.func @_pixel_shuffle3d_kernel(%arg0: i32, %arg1: i32, %arg2: i32, %arg3: memref<1x1x2x2x8x8x8xf32, #tpu.memory_space<vmem>>, %arg4: memref<1x8x1x8x32xf32, #tpu.memory_space<vmem>>) attributes {dimension_semantics = [#tpu.dimension_semantics<parallel>, #tpu.dimension_semantics<parallel>, #tpu.dimension_semantics<parallel>], iteration_bounds = array<i64: 4, 1, 2>, scalar_prefetch = 0 : i64, scratch_operands = 0 : i64, tpu.core_type = #tpu.core_type<tc>, window_params = [{transform_indices = @transform_0, window_bounds = array<i64: 1, 1, 2, 2, 8, 8, 8>}, {transform_indices = @transform_1, window_bounds = array<i64: 1, 8, 1, 8, 32>}]} {
    %0 = tpu.iota {dimensions = array<i32: 0>} : vector<8x16xi32>
    %1 = tpu.iota {dimensions = array<i32: 1>} : vector<8x16xi32>
    %c0 = arith.constant 0 : index
    %c0_0 = arith.constant 0 : index
    %c0_1 = arith.constant 0 : index
    %c0_2 = arith.constant 0 : index
    %c0_3 = arith.constant 0 : index
    %c0_4 = arith.constant 0 : index
    %c0_5 = arith.constant 0 : index
    %2 = vector.load %arg3[%c0, %c0_0, %c0_1, %c0_2, %c0_3, %c0_4, %c0_5] : memref<1x1x2x2x8x8x8xf32, #tpu.memory_space<vmem>>, vector<1x1x2x1x8x8x8xf32>
    %3 = vector.shape_cast %2 : vector<1x1x2x1x8x8x8xf32> to vector<2x8x8x8xf32>
    %4 = vector.shape_cast %3 : vector<2x8x8x8xf32> to vector<128x8xf32>
    %5 = arith.truncf %4 : vector<128x8xf32> to vector<128x8xbf16>
    %6 = arith.extf %5 : vector<128x8xbf16> to vector<128x8xf32>
    %7 = arith.subf %4, %6 : vector<128x8xf32>
    %8 = arith.truncf %7 : vector<128x8xf32> to vector<128x8xbf16>
    %9 = arith.extf %8 : vector<128x8xbf16> to vector<128x8xf32>
    %10 = arith.subf %7, %9 : vector<128x8xf32>
    %11 = arith.truncf %10 : vector<128x8xf32> to vector<128x8xbf16>
    %c2_i32 = arith.constant 2 : i32
    %12 = vector.broadcast %c2_i32 : i32 to vector<8x16xi32>
    %13 = arith.muli %0, %12 : vector<8x16xi32>
    %c0_i32 = arith.constant 0 : i32
    %14 = vector.broadcast %c0_i32 : i32 to vector<8x16xi32>
    %15 = arith.addi %13, %14 : vector<8x16xi32>
    %16 = arith.cmpi eq, %1, %15 : vector<8x16xi32>
    %17 = arith.extui %16 : vector<8x16xi1> to vector<8x16xi32>
    %18 = arith.sitofp %17 : vector<8x16xi32> to vector<8x16xf32>
    %19 = arith.truncf %18 : vector<8x16xf32> to vector<8x16xbf16>
    %cst = arith.constant dense<0.000000e+00> : vector<128x16xf32>
    %20 = tpu.matmul %5, %19, %cst {dimension_numbers = #tpu.dot_dimension_numbers<[1], [0], [0], [1], [0, 0, 1, 1], [], []>} : vector<128x8xbf16>, vector<8x16xbf16>, vector<128x16xf32> -> vector<128x16xf32>
    %cst_6 = arith.constant dense<0.000000e+00> : vector<128x16xf32>
    %21 = tpu.matmul %8, %19, %cst_6 {dimension_numbers = #tpu.dot_dimension_numbers<[1], [0], [0], [1], [0, 0, 1, 1], [], []>} : vector<128x8xbf16>, vector<8x16xbf16>, vector<128x16xf32> -> vector<128x16xf32>
    %22 = arith.addf %20, %21 : vector<128x16xf32>
    %cst_7 = arith.constant dense<0.000000e+00> : vector<128x16xf32>
    %23 = tpu.matmul %11, %19, %cst_7 {dimension_numbers = #tpu.dot_dimension_numbers<[1], [0], [0], [1], [0, 0, 1, 1], [], []>} : vector<128x8xbf16>, vector<8x16xbf16>, vector<128x16xf32> -> vector<128x16xf32>
    %24 = arith.addf %22, %23 : vector<128x16xf32>
    %c0_8 = arith.constant 0 : index
    %c0_9 = arith.constant 0 : index
    %c0_10 = arith.constant 0 : index
    %c1 = arith.constant 1 : index
    %c0_11 = arith.constant 0 : index
    %c0_12 = arith.constant 0 : index
    %c0_13 = arith.constant 0 : index
    %25 = vector.load %arg3[%c0_8, %c0_9, %c0_10, %c1, %c0_11, %c0_12, %c0_13] : memref<1x1x2x2x8x8x8xf32, #tpu.memory_space<vmem>>, vector<1x1x2x1x8x8x8xf32>
    %26 = vector.shape_cast %25 : vector<1x1x2x1x8x8x8xf32> to vector<2x8x8x8xf32>
    %27 = vector.shape_cast %26 : vector<2x8x8x8xf32> to vector<128x8xf32>
    %28 = arith.truncf %27 : vector<128x8xf32> to vector<128x8xbf16>
    %29 = arith.extf %28 : vector<128x8xbf16> to vector<128x8xf32>
    %30 = arith.subf %27, %29 : vector<128x8xf32>
    %31 = arith.truncf %30 : vector<128x8xf32> to vector<128x8xbf16>
    %32 = arith.extf %31 : vector<128x8xbf16> to vector<128x8xf32>
    %33 = arith.subf %30, %32 : vector<128x8xf32>
    %34 = arith.truncf %33 : vector<128x8xf32> to vector<128x8xbf16>
    %c2_i32_14 = arith.constant 2 : i32
    %35 = vector.broadcast %c2_i32_14 : i32 to vector<8x16xi32>
    %36 = arith.muli %0, %35 : vector<8x16xi32>
    %c1_i32 = arith.constant 1 : i32
    %37 = vector.broadcast %c1_i32 : i32 to vector<8x16xi32>
    %38 = arith.addi %36, %37 : vector<8x16xi32>
    %39 = arith.cmpi eq, %1, %38 : vector<8x16xi32>
    %40 = arith.extui %39 : vector<8x16xi1> to vector<8x16xi32>
    %41 = arith.sitofp %40 : vector<8x16xi32> to vector<8x16xf32>
    %42 = arith.truncf %41 : vector<8x16xf32> to vector<8x16xbf16>
    %cst_15 = arith.constant dense<0.000000e+00> : vector<128x16xf32>
    %43 = tpu.matmul %28, %42, %cst_15 {dimension_numbers = #tpu.dot_dimension_numbers<[1], [0], [0], [1], [0, 0, 1, 1], [], []>} : vector<128x8xbf16>, vector<8x16xbf16>, vector<128x16xf32> -> vector<128x16xf32>
    %44 = arith.addf %24, %43 : vector<128x16xf32>
    %cst_16 = arith.constant dense<0.000000e+00> : vector<128x16xf32>
    %45 = tpu.matmul %31, %42, %cst_16 {dimension_numbers = #tpu.dot_dimension_numbers<[1], [0], [0], [1], [0, 0, 1, 1], [], []>} : vector<128x8xbf16>, vector<8x16xbf16>, vector<128x16xf32> -> vector<128x16xf32>
    %46 = arith.addf %44, %45 : vector<128x16xf32>
    %cst_17 = arith.constant dense<0.000000e+00> : vector<128x16xf32>
    %47 = tpu.matmul %34, %42, %cst_17 {dimension_numbers = #tpu.dot_dimension_numbers<[1], [0], [0], [1], [0, 0, 1, 1], [], []>} : vector<128x8xbf16>, vector<8x16xbf16>, vector<128x16xf32> -> vector<128x16xf32>
    %48 = arith.addf %46, %47 : vector<128x16xf32>
    %49 = vector.shape_cast %48 : vector<128x16xf32> to vector<16x8x16xf32>
    %50 = vector.shape_cast %49 : vector<16x8x16xf32> to vector<2x8x8x16xf32>
    %51 = vector.extract_strided_slice %50 {offsets = [0, 0, 0, 0], sizes = [1, 8, 8, 16], strides = [1, 1, 1, 1]} : vector<2x8x8x16xf32> to vector<1x8x8x16xf32>
    %52 = vector.shape_cast %51 : vector<1x8x8x16xf32> to vector<8x8x16xf32>
    %53 = vector.extract_strided_slice %50 {offsets = [1, 0, 0, 0], sizes = [1, 8, 8, 16], strides = [1, 1, 1, 1]} : vector<2x8x8x16xf32> to vector<1x8x8x16xf32>
    %54 = vector.shape_cast %53 : vector<1x8x8x16xf32> to vector<8x8x16xf32>
    %55 = tpu.concatenate %52, %54 in 2 : vector<8x8x16xf32>, vector<8x8x16xf32> -> vector<8x8x32xf32>
    %c0_18 = arith.constant 0 : index
    %c0_19 = arith.constant 0 : index
    %c0_20 = arith.constant 0 : index
    %c0_21 = arith.constant 0 : index
    %c0_22 = arith.constant 0 : index
    %56 = vector.load %arg4[%c0_18, %c0_19, %c0_20, %c0_21, %c0_22] : memref<1x8x1x8x32xf32, #tpu.memory_space<vmem>>, vector<1x8x1x8x32xf32>
    %57 = vector.shape_cast %56 : vector<1x8x1x8x32xf32> to vector<8x8x32xf32>
    %58 = vector.shape_cast %55 : vector<8x8x32xf32> to vector<1x8x1x8x32xf32>
    tpu.vector_store %arg4[%c0_18, %c0_19, %c0_20, %c0_21, %c0_22], %58 {strides = array<i32>} : memref<1x8x1x8x32xf32, #tpu.memory_space<vmem>>, vector<1x8x1x8x32xf32>,
    return
  }
  func.func @transform_0(%arg0: i32, %arg1: i32, %arg2: i32) -> (i32, i32, i32, i32, i32, i32, i32) {
    %c0_i32 = arith.constant 0 : i32
    %c0_i32_0 = arith.constant 0 : i32
    %c0_i32_1 = arith.constant 0 : i32
    %c0_i32_2 = arith.constant 0 : i32
    %c0_i32_3 = arith.constant 0 : i32
    return %arg0, %arg2, %c0_i32, %c0_i32_0, %arg1, %c0_i32_1, %c0_i32_2 : i32, i32, i32, i32, i32, i32, i32
  }
  func.func @transform_1(%arg0: i32, %arg1: i32, %arg2: i32) -> (i32, i32, i32, i32, i32) {
    %c0_i32 = arith.constant 0 : i32
    %c0_i32_0 = arith.constant 0 : i32
    %c0_i32_1 = arith.constant 0 : i32
    return %arg0, %arg1, %arg2, %c0_i32, %c0_i32_0 : i32, i32, i32, i32, i32
  }
}

</mosaic_0001>

<llo_original>
// kernel: tpu_custom_call.1
$region0: #{tpu_custom_call.1}
  #allocation0 [shape = 'u32[]', space=smem, size = 0x4, offset = 0x4, fixed_abs, tag = 'smem constant byte address 0x4 - core index']
  #allocation1 [shape = 'u32[72,128]{1,0:T(1,128)}', space=vmem, size = 0x9000, scoped, tag = 'internal scratch']
  %s0 = inlined_call_operand.hbm [shape: f32[4,2,2,2,8,8,8], index: 0, kind: input, shape index: {}]
  %s1 = inlined_call_operand.hbm [shape: f32[4,8,2,8,32], index: 1, kind: output, shape index: {}]
  %s2 = sld [smem:[#allocation0]]
  $region41: #{tpu_custom_call.1} parent=0
    _
  %s4 = ssub.s32 1, %s2
  %s5 = scalar_select 0, %s4, %s2
  $region1: #{tpu_custom_call.1} parent=0
    #allocation2 [shape = 'u8[262144]{0}', space=vmem, size = 0x40000, scoped, tag = 'input window, operand 0']
    #allocation3 [shape = 's32[2]{0}', space=sflag, size = 0x8, scoped, tag = 'scoped memory for tpu_custom_call.1']
    #allocation4 [shape = 's32[2]{0}', space=sflag, size = 0x8, scoped, tag = 'scoped memory for tpu_custom_call.1']
    #allocation5 [shape = 'u8[65536]{0}', space=vmem, size = 0x10000, scoped, tag = 'output window, operand 0']
    %6 = vsyncpa [#allocation3], 0
    %s7 = scalar_lea.sflag [#allocation3], 1
    %8 = vsyncpa %s7, 0
    %9 = vsyncpa [#allocation4], 0
    %s10 = scalar_lea.sflag [#allocation4], 1
    %11 = vsyncpa %s10, 0
    loop: start=0, step=1, limit=10
    $region2: #{tpu_custom_call.1} parent=1 // loop_pre_header
      _
    $region3: #{tpu_custom_call.1} parent=1 // loop_header
      %s13 = sphi 0, %s17
      %p14 = scmp.ge.s32.totalorder %s13, 10
      %s20 = sphi 0, %s39
      %s21 = sphi 0, %s35
      %s22 = sphi 0, %s31
      %s23 = sphi 0, %s20
      %s24 = sphi 0, %s21
      %s25 = sphi 0, %s22
      %s26 = sphi 0, %s23
      %s27 = sphi 0, %s24
      %s28 = sphi 0, %s25
      %s46 = sphi 0, %s48
      %s49 = sphi 0, %s46
      %s50 = sphi 0, %s49
      %s66 = sphi 0, %s50
      %s76 = sphi 0, %s78
      %s79 = sphi 0, %s76
      %s80 = sphi 0, %s79
      %s96 = sphi 0, %s80
    $region4: #{tpu_custom_call.1} parent=1 // loop_header_branch
      %16 = sbr.rel (%p14) target = $region8
    $region5: #{tpu_custom_call.1} parent=1 // loop_body
      %s18 = ssub.s32 %s13, 1
      %s19 = ssub.s32 %s13, 2
      %s29 = sadd.s32 1, %s22
      %p30 = scmp.ge.s32.totalorder %s29, 2
      %s31 = scalar_select %p30, 0, %s29
      %s32 = sadd.s32 1, %s21
      %s33 = scalar_select %p30, %s32, %s21
      %p34 = scmp.ge.s32.totalorder %s33, 1
      %s35 = scalar_select %p34, 0, %s33
      %s36 = sadd.s32 1, %s20
      %s37 = scalar_select %p34, %s36, %s20
      %p38 = scmp.ge.s32.totalorder %s37, 4
      %s39 = scalar_select %p38, 0, %s37
      %s40 = ssub.s32 %s20, %s39
      %s41 = ssub.s32 %s22, %s31
      %s42 = sor.u32 %s40, %s41
      %s43 = ssub.s32 %s21, %s35
      %s44 = sor.u32 %s42, %s43
      %p45 = scmp.eq.s32.totalorder %s44, 0
      %s47 = sadd.s32 %s46, 1
      %s48 = scalar_select %p45, %s46, %s47
      %p51 = pneg %p45
      %p52 = scmp.eq.s32.totalorder %s13, 7
      %p53 = por %p51, %p52
      %p54 = scmp.ne.s32.totalorder %s46, %s49
      %p55 = scmp.eq.s32.totalorder %s13, 0
      %p56 = por %p54, %p55
      %p57 = scmp.ne.s32.totalorder %s46, %s49
      %p58 = scmp.eq.s32.totalorder %s18, 7
      %p59 = por %p57, %p58
      %p60 = scmp.ne.s32.totalorder %s49, %s50
      %p61 = scmp.eq.s32.totalorder %s18, 0
      %p62 = por %p60, %p61
      %p63 = scmp.ne.s32.totalorder %s49, %s50
      %p64 = scmp.eq.s32.totalorder %s19, 7
      %p65 = por %p63, %p64
      %p67 = scmp.ne.s32.totalorder %s50, %s66
      %p68 = scmp.eq.s32.totalorder %s19, 0
      %p69 = por %p67, %p68
      %s70 = ssub.s32 %s20, %s39
      %s71 = ssub.s32 %s21, %s35
      %s72 = sor.u32 %s70, %s71
      %s73 = ssub.s32 %s22, %s31
      %s74 = sor.u32 %s72, %s73
      %p75 = scmp.eq.s32.totalorder %s74, 0
      %s77 = sadd.s32 %s76, 1
      %s78 = scalar_select %p75, %s76, %s77
      %p81 = pneg %p75
      %p82 = scmp.eq.s32.totalorder %s13, 7
      %p83 = por %p81, %p82
      %p84 = scmp.ne.s32.totalorder %s76, %s79
      %p85 = scmp.eq.s32.totalorder %s13, 0
      %p86 = por %p84, %p85
      %p87 = scmp.ne.s32.totalorder %s76, %s79
      %p88 = scmp.eq.s32.totalorder %s18, 7
      %p89 = por %p87, %p88
      %p90 = scmp.ne.s32.totalorder %s79, %s80
      %p91 = scmp.eq.s32.totalorder %s18, 0
      %p92 = por %p90, %p91
      %p93 = scmp.ne.s32.totalorder %s79, %s80
      %p94 = scmp.eq.s32.totalorder %s19, 7
      %p95 = por %p93, %p94
      %p97 = scmp.ne.s32.totalorder %s80, %s96
      %p98 = scmp.eq.s32.totalorder %s19, 0
      %p99 = por %p97, %p98
      %p100 = scmp.le.s32.totalorder 1, %s13
      %p101 = scmp.lt.s32.totalorder %s13, 9
      %p102 = pnand %p100, %p101
      %p103 = pneg %p102
      // Predicated region
      $region9: #{tpu_custom_call.1} parent=5 // pred_check
        _
      $region10: #{tpu_custom_call.1} parent=5 // pred_check_branch
        %105 = sbr.rel (%p102) target = $region12
      $region11: #{tpu_custom_call.1} parent=5 // pred_region
        %s106 = ssub.s32 %s13, 1
      $region12: #{tpu_custom_call.1} parent=5 // pred_fallthru
        _
      %p107 = scmp.lt.s32.totalorder %s13, 8
      // Predicated region
      $region13: #{tpu_custom_call.1} parent=5 // pred_check
        %p108 = pneg %p107
      $region14: #{tpu_custom_call.1} parent=5 // pred_check_branch
        %110 = sbr.rel (%p108) target = $region16
      $region15: #{tpu_custom_call.1} parent=5 // pred_region
        // Predicated region
        $region17: #{tpu_custom_call.1} parent=15 // pred_check
          %p111 = pneg %p56
        $region18: #{tpu_custom_call.1} parent=15 // pred_check_branch
          %113 = sbr.rel (%p111) target = $region20
        $region19: #{tpu_custom_call.1} parent=15 // pred_region
          %s114 = sand.u32 %s46, 1
          %s115 = scalar_lea.sflag [#allocation3], %s114
          %s116 = sand.u32 %s46, 1
          %s117 = smul.addr %s116, 256
          %s118 = scalar_lea.vmem [#allocation2], %s117
          %s119 = smul.u32 8, %s21
          %121 = vsyncadd %s115, 0
          %s122 = smul.addr %s22, 32
          %s123 = sadd.s32 %s119, %s122
          %s124 = smul.addr %s20, 64
          %s125 = sadd.s32 %s123, %s124
          %s126 = smul.addr %s125, 8
          %s127 = scalar_lea.hbm %s0, %s126
          %s128 = sshll.u32 %s127, 4
          %s129 = int_to_ptr.hbm [resolvable:$true] %s128
          %s130 = sshll.u32 %s118, 4
          %s131 = int_to_ptr.vmem [resolvable:$true] %s130
          %136 = dma.hbm_to_vmem [thread:$0]  %s129, 4096, %s131, %s115, 128, 128, 8
        $region20: #{tpu_custom_call.1} parent=15 // pred_fallthru
          _
      $region16: #{tpu_custom_call.1} parent=5 // pred_fallthru
        _
      %p137 = scmp.le.s32.totalorder 1, %s13
      %p138 = scmp.lt.s32.totalorder %s13, 9
      %p139 = pnand %p137, %p138
      %p140 = pneg %p139
      // Predicated region
      $region21: #{tpu_custom_call.1} parent=5 // pred_check
        _
      $region22: #{tpu_custom_call.1} parent=5 // pred_check_branch
        %142 = sbr.rel (%p139) target = $region24
      $region23: #{tpu_custom_call.1} parent=5 // pred_region
        %s143 = ssub.s32 %s13, 1
        %s144 = sand.u32 %s49, 1
        %s145 = scalar_lea.sflag [#allocation3], %s144
        %s146 = sand.u32 %s49, 1
        %s147 = smul.addr %s146, 256
        %s148 = scalar_lea.vmem [#allocation2], %s147
        // Predicated region
        $region25: #{tpu_custom_call.1} parent=23 // pred_check
          %p149 = pneg %p62
        $region26: #{tpu_custom_call.1} parent=23 // pred_check_branch
          %151 = sbr.rel (%p149) target = $region28
        $region27: #{tpu_custom_call.1} parent=23 // pred_region
          %153 = dma.done %s145, 4096
        $region28: #{tpu_custom_call.1} parent=23 // pred_fallthru
          _
        %s154 = sand.u32 %s49, 1
        %s155 = scalar_lea.sflag [#allocation3], %s154
        %s156 = sand.u32 %s49, 1
        %s157 = smul.addr %s156, 256
        %s158 = scalar_lea.vmem [#allocation2], %s157
        %p159 = pneg %p62
        %p160 = pneg %p59
        %p161 = pneg %p92
        %p162 = pneg %p89
        %s163 = sand.u32 %s79, 1
        %s164 = scalar_lea.sflag [#allocation4], %s163
        %s165 = sand.u32 %s79, 1
        %s166 = smul.addr %s165, 64
        %s167 = scalar_lea.vmem [#allocation5], %s166
        %s168 = smul.u32 8, %s24
        %s169 = smul.u32 8, %s24
        %v171 = vlaneseq
        %v172 = vshrl.u32 %v171, 7
        %v173 = vlaneseq
        %v174 = vand.u32 %v173, 127
        %v175 = vld [vmem:[%s148] sm:$0xff]
        %v176 = vld [vmem:[%s148 + $0x8] sm:$0xff]
        %v177 = vld [vmem:[%s148 + $0x10] sm:$0xff]
        %v178 = vld [vmem:[%s148 + $0x18] sm:$0xff]
        %v179 = vld [vmem:[%s148 + $0x20] sm:$0xff]
        %v180 = vld [vmem:[%s148 + $0x28] sm:$0xff]
        %v181 = vld [vmem:[%s148 + $0x30] sm:$0xff]
        %v182 = vld [vmem:[%s148 + $0x38] sm:$0xff]
        %v183 = vld [vmem:[%s148 + $0x80] sm:$0xff]
        %v184 = vld [vmem:[%s148 + $0x88] sm:$0xff]
        %v185 = vld [vmem:[%s148 + $0x90] sm:$0xff]
        %v186 = vld [vmem:[%s148 + $0x98] sm:$0xff]
        %v187 = vld [vmem:[%s148 + $0xa0] sm:$0xff]
        %v188 = vld [vmem:[%s148 + $0xa8] sm:$0xff]
        %v189 = vld [vmem:[%s148 + $0xb0] sm:$0xff]
        %v190 = vld [vmem:[%s148 + $0xb8] sm:$0xff]
        %v191 = vpack.c.bf16 %v175, %v175
        %v192 = vpack.c.bf16 %v176, %v176
        %v193 = vpack.c.bf16 %v177, %v177
        %v194 = vpack.c.bf16 %v178, %v178
        %v195 = vpack.c.bf16 %v179, %v179
        %v196 = vpack.c.bf16 %v180, %v180
        %v197 = vpack.c.bf16 %v181, %v181
        %v198 = vpack.c.bf16 %v182, %v182
        %v199 = vpack.c.bf16 %v183, %v183
        %v200 = vpack.c.bf16 %v184, %v184
        %v201 = vpack.c.bf16 %v185, %v185
        %v202 = vpack.c.bf16 %v186, %v186
        %v203 = vpack.c.bf16 %v187, %v187
        %v204 = vpack.c.bf16 %v188, %v188
        %v205 = vpack.c.bf16 %v189, %v189
        %v206 = vpack.c.bf16 %v190, %v190
        %v207 = vunpack.c.l.bf16 %v191
        %v208 = vunpack.c.l.bf16 %v192
        %v209 = vunpack.c.l.bf16 %v193
        %v210 = vunpack.c.l.bf16 %v194
        %v211 = vunpack.c.l.bf16 %v195
        %v212 = vunpack.c.l.bf16 %v196
        %v213 = vunpack.c.l.bf16 %v197
        %v214 = vunpack.c.l.bf16 %v198
        %v215 = vunpack.c.l.bf16 %v199
        %v216 = vunpack.c.l.bf16 %v200
        %v217 = vunpack.c.l.bf16 %v201
        %v218 = vunpack.c.l.bf16 %v202
        %v219 = vunpack.c.l.bf16 %v203
        %v220 = vunpack.c.l.bf16 %v204
        %v221 = vunpack.c.l.bf16 %v205
        %v222 = vunpack.c.l.bf16 %v206
        %v223 = vsub.f32 %v175, %v207
        %v224 = vsub.f32 %v176, %v208
        %v225 = vsub.f32 %v177, %v209
        %v226 = vsub.f32 %v178, %v210
        %v227 = vsub.f32 %v179, %v211
        %v228 = vsub.f32 %v180, %v212
        %v229 = vsub.f32 %v181, %v213
        %v230 = vsub.f32 %v182, %v214
        %v231 = vsub.f32 %v183, %v215
        %v232 = vsub.f32 %v184, %v216
        %v233 = vsub.f32 %v185, %v217
        %v234 = vsub.f32 %v186, %v218
        %v235 = vsub.f32 %v187, %v219
        %v236 = vsub.f32 %v188, %v220
        %v237 = vsub.f32 %v189, %v221
        %v238 = vsub.f32 %v190, %v222
        %v239 = vpack.c.bf16 %v223, %v223
        %v240 = vpack.c.bf16 %v224, %v224
        %v241 = vpack.c.bf16 %v225, %v225
        %v242 = vpack.c.bf16 %v226, %v226
        %v243 = vpack.c.bf16 %v227, %v227
        %v244 = vpack.c.bf16 %v228, %v228
        %v245 = vpack.c.bf16 %v229, %v229
        %v246 = vpack.c.bf16 %v230, %v230
        %v247 = vpack.c.bf16 %v231, %v231
        %v248 = vpack.c.bf16 %v232, %v232
        %v249 = vpack.c.bf16 %v233, %v233
        %v250 = vpack.c.bf16 %v234, %v234
        %v251 = vpack.c.bf16 %v235, %v235
        %v252 = vpack.c.bf16 %v236, %v236
        %v253 = vpack.c.bf16 %v237, %v237
        %v254 = vpack.c.bf16 %v238, %v238
        %v255 = vunpack.c.l.bf16 %v239
        %v256 = vunpack.c.l.bf16 %v240
        %v257 = vunpack.c.l.bf16 %v241
        %v258 = vunpack.c.l.bf16 %v242
        %v259 = vunpack.c.l.bf16 %v243
        %v260 = vunpack.c.l.bf16 %v244
        %v261 = vunpack.c.l.bf16 %v245
        %v262 = vunpack.c.l.bf16 %v246
        %v263 = vunpack.c.l.bf16 %v247
        %v264 = vunpack.c.l.bf16 %v248
        %v265 = vunpack.c.l.bf16 %v249
        %v266 = vunpack.c.l.bf16 %v250
        %v267 = vunpack.c.l.bf16 %v251
        %v268 = vunpack.c.l.bf16 %v252
        %v269 = vunpack.c.l.bf16 %v253
        %v270 = vunpack.c.l.bf16 %v254
        %v271 = vsub.f32 %v223, %v255
        %v272 = vsub.f32 %v224, %v256
        %v273 = vsub.f32 %v225, %v257
        %v274 = vsub.f32 %v226, %v258
        %v275 = vsub.f32 %v227, %v259
        %v276 = vsub.f32 %v228, %v260
        %v277 = vsub.f32 %v229, %v261
        %v278 = vsub.f32 %v230, %v262
        %v279 = vsub.f32 %v231, %v263
        %v280 = vsub.f32 %v232, %v264
        %v281 = vsub.f32 %v233, %v265
        %v282 = vsub.f32 %v234, %v266
        %v283 = vsub.f32 %v235, %v267
        %v284 = vsub.f32 %v236, %v268
        %v285 = vsub.f32 %v237, %v269
        %v286 = vsub.f32 %v238, %v270
        %v287 = vpack.c.bf16 %v272, %v271
        %v288 = vpack.c.bf16 %v274, %v273
        %v289 = vpack.c.bf16 %v276, %v275
        %v290 = vpack.c.bf16 %v278, %v277
        %v291 = vpack.c.bf16 %v280, %v279
        %v292 = vpack.c.bf16 %v282, %v281
        %v293 = vpack.c.bf16 %v284, %v283
        %v294 = vpack.c.bf16 %v286, %v285
        %v295 = vmul.u32 %v172, 2
        %vm296 = vcmp.eq.s32.totalorder %v174, %v295
        %v297 = vsel %vm296, 1, 0
        %v298 = vcvt.s32.f32 %v297
        %v299 = vpack.c.bf16 %v298, %v298
        %v316 = vunpack.c.l.b16 %v239
        %v317 = vunpack.c.l.b16 %v240
        %v318 = vunpack.c.l.b16 %v241
        %v319 = vunpack.c.l.b16 %v242
        %v320 = vunpack.c.l.b16 %v243
        %v321 = vunpack.c.l.b16 %v244
        %v322 = vunpack.c.l.b16 %v245
        %v323 = vunpack.c.l.b16 %v246
        %v324 = vunpack.c.l.b16 %v247
        %v325 = vunpack.c.l.b16 %v248
        %v326 = vunpack.c.l.b16 %v249
        %v327 = vunpack.c.l.b16 %v250
        %v328 = vunpack.c.l.b16 %v251
        %v329 = vunpack.c.l.b16 %v252
        %v330 = vunpack.c.l.b16 %v253
        %v331 = vunpack.c.l.b16 %v254
        %v332 = vpack.c.b16 %v317, %v316
        %v333 = vpack.c.b16 %v319, %v318
        %v334 = vpack.c.b16 %v321, %v320
        %v335 = vpack.c.b16 %v323, %v322
        %v336 = vpack.c.b16 %v325, %v324
        %v337 = vpack.c.b16 %v327, %v326
        %v338 = vpack.c.b16 %v329, %v328
        %v339 = vpack.c.b16 %v331, %v330
        %vm340 = vcmask 64512
        %v342 = vsel %vm340, %v332, 0
        %v345 = vsel %vm340, %v333, 0
        %v348 = vsel %vm340, %v334, 0
        %v351 = vsel %vm340, %v335, 0
        %v354 = vsel %vm340, %v336, 0
        %v357 = vsel %vm340, %v337, 0
        %v360 = vsel %vm340, %v338, 0
        %v363 = vsel %vm340, %v339, 0
        %vm365 = vcmask 1043456
        %v367 = vsel %vm365, %v299, 0
        %369 = vmatpush.bf16.msra.mxu0 0
        %370 = vmatpush.bf16.msra.mxu0 0
        %371 = vmatpush.bf16.msra.mxu0 0
        %372 = vmatpush.bf16.msra.mxu0 0
        %373 = vmatpush.bf16.msra.mxu0 0
        %374 = vmatpush.bf16.msra.mxu0 0
        %375 = vmatpush.bf16.msra.mxu0 0
        %376 = vmatpush.bf16.msra.mxu0 %v367
        %377 = vmatmul.bf16.gmra.mxu0 %v342
        %v378 = vpop.f32.mrf.mxu0
        %v379 = vadd.f32 0.0, %v378
        %v380 = vpop.f32.mrf.mxu0
        %v381 = vadd.f32 0.0, %v380
        %382 = vmatmul.bf16.gmra.mxu0 %v345
        %v383 = vpop.f32.mrf.mxu0
        %v384 = vadd.f32 0.0, %v383
        %v385 = vpop.f32.mrf.mxu0
        %v386 = vadd.f32 0.0, %v385
        %387 = vmatmul.bf16.gmra.mxu0 %v348
        %v388 = vpop.f32.mrf.mxu0
        %v389 = vadd.f32 0.0, %v388
        %v390 = vpop.f32.mrf.mxu0
        %v391 = vadd.f32 0.0, %v390
        %392 = vmatmul.bf16.gmra.mxu0 %v351
        %v393 = vpop.f32.mrf.mxu0
        %v394 = vadd.f32 0.0, %v393
        %v395 = vpop.f32.mrf.mxu0
        %v396 = vadd.f32 0.0, %v395
        %397 = vmatmul.bf16.gmra.mxu0 %v354
        %v398 = vpop.f32.mrf.mxu0
        %v399 = vadd.f32 0.0, %v398
        %v400 = vpop.f32.mrf.mxu0
        %v401 = vadd.f32 0.0, %v400
        %402 = vmatmul.bf16.gmra.mxu0 %v357
        %v403 = vpop.f32.mrf.mxu0
        %v404 = vadd.f32 0.0, %v403
        %v405 = vpop.f32.mrf.mxu0
        %v406 = vadd.f32 0.0, %v405
        %407 = vmatmul.bf16.gmra.mxu0 %v360
        %v408 = vpop.f32.mrf.mxu0
        %v409 = vadd.f32 0.0, %v408
        %v410 = vpop.f32.mrf.mxu0
        %v411 = vadd.f32 0.0, %v410
        %412 = vmatmul.bf16.gmra.mxu0 %v363
        %v413 = vpop.f32.mrf.mxu0
        %v414 = vadd.f32 0.0, %v413
        %v415 = vpop.f32.mrf.mxu0
        %v416 = vadd.f32 0.0, %v415
        %417 = vdwg.mxu0
        %v434 = vunpack.c.l.b16 %v191
        %v435 = vunpack.c.l.b16 %v192
        %v436 = vunpack.c.l.b16 %v193
        %v437 = vunpack.c.l.b16 %v194
        %v438 = vunpack.c.l.b16 %v195
        %v439 = vunpack.c.l.b16 %v196
        %v440 = vunpack.c.l.b16 %v197
        %v441 = vunpack.c.l.b16 %v198
        %v442 = vunpack.c.l.b16 %v199
        %v443 = vunpack.c.l.b16 %v200
        %v444 = vunpack.c.l.b16 %v201
        %v445 = vunpack.c.l.b16 %v202
        %v446 = vunpack.c.l.b16 %v203
        %v447 = vunpack.c.l.b16 %v204
        %v448 = vunpack.c.l.b16 %v205
        %v449 = vunpack.c.l.b16 %v206
        %v450 = vpack.c.b16 %v435, %v434
        %v451 = vpack.c.b16 %v437, %v436
        %v452 = vpack.c.b16 %v439, %v438
        %v453 = vpack.c.b16 %v441, %v440
        %v454 = vpack.c.b16 %v443, %v442
        %v455 = vpack.c.b16 %v445, %v444
        %v456 = vpack.c.b16 %v447, %v446
        %v457 = vpack.c.b16 %v449, %v448
        %v459 = vsel %vm340, %v450, 0
        %v462 = vsel %vm340, %v451, 0
        %v465 = vsel %vm340, %v452, 0
        %v468 = vsel %vm340, %v453, 0
        %v471 = vsel %vm340, %v454, 0
        %v474 = vsel %vm340, %v455, 0
        %v477 = vsel %vm340, %v456, 0
        %v480 = vsel %vm340, %v457, 0
        %482 = vmatpush.bf16.msra.mxu0 0
        %483 = vmatpush.bf16.msra.mxu0 0
        %484 = vmatpush.bf16.msra.mxu0 0
        %485 = vmatpush.bf16.msra.mxu0 0
        %486 = vmatpush.bf16.msra.mxu0 0
        %487 = vmatpush.bf16.msra.mxu0 0
        %488 = vmatpush.bf16.msra.mxu0 0
        %489 = vmatpush.bf16.msra.mxu0 %v367
        %490 = vmatmul.bf16.gmra.mxu0 %v459
        %v491 = vpop.f32.mrf.mxu0
        %v492 = vadd.f32 %v379, %v491
        %v493 = vpop.f32.mrf.mxu0
        %v494 = vadd.f32 %v381, %v493
        %495 = vmatmul.bf16.gmra.mxu0 %v462
        %v496 = vpop.f32.mrf.mxu0
        %v497 = vadd.f32 %v384, %v496
        %v498 = vpop.f32.mrf.mxu0
        %v499 = vadd.f32 %v386, %v498
        %500 = vmatmul.bf16.gmra.mxu0 %v465
        %v501 = vpop.f32.mrf.mxu0
        %v502 = vadd.f32 %v389, %v501
        %v503 = vpop.f32.mrf.mxu0
        %v504 = vadd.f32 %v391, %v503
        %505 = vmatmul.bf16.gmra.mxu0 %v468
        %v506 = vpop.f32.mrf.mxu0
        %v507 = vadd.f32 %v394, %v506
        %v508 = vpop.f32.mrf.mxu0
        %v509 = vadd.f32 %v396, %v508
        %510 = vmatmul.bf16.gmra.mxu0 %v471
        %v511 = vpop.f32.mrf.mxu0
        %v512 = vadd.f32 %v399, %v511
        %v513 = vpop.f32.mrf.mxu0
        %v514 = vadd.f32 %v401, %v513
        %515 = vmatmul.bf16.gmra.mxu0 %v474
        %v516 = vpop.f32.mrf.mxu0
        %v517 = vadd.f32 %v404, %v516
        %v518 = vpop.f32.mrf.mxu0
        %v519 = vadd.f32 %v406, %v518
        %520 = vmatmul.bf16.gmra.mxu0 %v477
        %v521 = vpop.f32.mrf.mxu0
        %v522 = vadd.f32 %v409, %v521
        %v523 = vpop.f32.mrf.mxu0
        %v524 = vadd.f32 %v411, %v523
        %525 = vmatmul.bf16.gmra.mxu0 %v480
        %v526 = vpop.f32.mrf.mxu0
        %v527 = vadd.f32 %v414, %v526
        %v528 = vpop.f32.mrf.mxu0
        %v529 = vadd.f32 %v416, %v528
        %530 = vdwg.mxu0
        %v532 = vsel %vm340, %v287, 0
        %v535 = vsel %vm340, %v288, 0
        %v538 = vsel %vm340, %v289, 0
        %v541 = vsel %vm340, %v290, 0
        %v544 = vsel %vm340, %v291, 0
        %v547 = vsel %vm340, %v292, 0
        %v550 = vsel %vm340, %v293, 0
        %v553 = vsel %vm340, %v294, 0
        %555 = vmatpush.bf16.msra.mxu0 0
        %556 = vmatpush.bf16.msra.mxu0 0
        %557 = vmatpush.bf16.msra.mxu0 0
        %558 = vmatpush.bf16.msra.mxu0 0
        %559 = vmatpush.bf16.msra.mxu0 0
        %560 = vmatpush.bf16.msra.mxu0 0
        %561 = vmatpush.bf16.msra.mxu0 0
        %562 = vmatpush.bf16.msra.mxu0 %v367
        %563 = vmatmul.bf16.gmra.mxu0 %v532
        %v564 = vpop.f32.mrf.mxu0
        %v565 = vadd.f32 0.0, %v564
        %v566 = vpop.f32.mrf.mxu0
        %v567 = vadd.f32 0.0, %v566
        %568 = vmatmul.bf16.gmra.mxu0 %v535
        %v569 = vpop.f32.mrf.mxu0
        %v570 = vadd.f32 0.0, %v569
        %v571 = vpop.f32.mrf.mxu0
        %v572 = vadd.f32 0.0, %v571
        %573 = vmatmul.bf16.gmra.mxu0 %v538
        %v574 = vpop.f32.mrf.mxu0
        %v575 = vadd.f32 0.0, %v574
        %v576 = vpop.f32.mrf.mxu0
        %v577 = vadd.f32 0.0, %v576
        %578 = vmatmul.bf16.gmra.mxu0 %v541
        %v579 = vpop.f32.mrf.mxu0
        %v580 = vadd.f32 0.0, %v579
        %v581 = vpop.f32.mrf.mxu0
        %v582 = vadd.f32 0.0, %v581
        %583 = vmatmul.bf16.gmra.mxu0 %v544
        %v584 = vpop.f32.mrf.mxu0
        %v585 = vadd.f32 0.0, %v584
        %v586 = vpop.f32.mrf.mxu0
        %v587 = vadd.f32 0.0, %v586
        %588 = vmatmul.bf16.gmra.mxu0 %v547
        %v589 = vpop.f32.mrf.mxu0
        %v590 = vadd.f32 0.0, %v589
        %v591 = vpop.f32.mrf.mxu0
        %v592 = vadd.f32 0.0, %v591
        %593 = vmatmul.bf16.gmra.mxu0 %v550
        %v594 = vpop.f32.mrf.mxu0
        %v595 = vadd.f32 0.0, %v594
        %v596 = vpop.f32.mrf.mxu0
        %v597 = vadd.f32 0.0, %v596
        %598 = vmatmul.bf16.gmra.mxu0 %v553
        %v599 = vpop.f32.mrf.mxu0
        %v600 = vadd.f32 0.0, %v599
        %v601 = vpop.f32.mrf.mxu0
        %v602 = vadd.f32 0.0, %v601
        %603 = vdwg.mxu0
        %v604 = vadd.f32 %v492, %v565
        %v605 = vadd.f32 %v494, %v567
        %v606 = vadd.f32 %v497, %v570
        %v607 = vadd.f32 %v499, %v572
        %v608 = vadd.f32 %v502, %v575
        %v609 = vadd.f32 %v504, %v577
        %v610 = vadd.f32 %v507, %v580
        %v611 = vadd.f32 %v509, %v582
        %v612 = vadd.f32 %v512, %v585
        %v613 = vadd.f32 %v514, %v587
        %v614 = vadd.f32 %v517, %v590
        %v615 = vadd.f32 %v519, %v592
        %v616 = vadd.f32 %v522, %v595
        %v617 = vadd.f32 %v524, %v597
        %v618 = vadd.f32 %v527, %v600
        %v619 = vadd.f32 %v529, %v602
        %s620 = scalar_lea.vmem %s148, 64 [#allocation2]
        %v621 = vld [vmem:[%s620] sm:$0xff]
        %v622 = vld [vmem:[%s620 + $0x8] sm:$0xff]
        %v623 = vld [vmem:[%s620 + $0x10] sm:$0xff]
        %v624 = vld [vmem:[%s620 + $0x18] sm:$0xff]
        %v625 = vld [vmem:[%s620 + $0x20] sm:$0xff]
        %v626 = vld [vmem:[%s620 + $0x28] sm:$0xff]
        %v627 = vld [vmem:[%s620 + $0x30] sm:$0xff]
        %v628 = vld [vmem:[%s620 + $0x38] sm:$0xff]
        %v629 = vld [vmem:[%s620 + $0x80] sm:$0xff]
        %v630 = vld [vmem:[%s620 + $0x88] sm:$0xff]
        %v631 = vld [vmem:[%s620 + $0x90] sm:$0xff]
        %v632 = vld [vmem:[%s620 + $0x98] sm:$0xff]
        %v633 = vld [vmem:[%s620 + $0xa0] sm:$0xff]
        %v634 = vld [vmem:[%s620 + $0xa8] sm:$0xff]
        %v635 = vld [vmem:[%s620 + $0xb0] sm:$0xff]
        %v636 = vld [vmem:[%s620 + $0xb8] sm:$0xff]
        %v637 = vpack.c.bf16 %v621, %v621
        %v638 = vpack.c.bf16 %v622, %v622
        %v639 = vpack.c.bf16 %v623, %v623
        %v640 = vpack.c.bf16 %v624, %v624
        %v641 = vpack.c.bf16 %v625, %v625
        %v642 = vpack.c.bf16 %v626, %v626
        %v643 = vpack.c.bf16 %v627, %v627
        %v644 = vpack.c.bf16 %v628, %v628
        %v645 = vpack.c.bf16 %v629, %v629
        %v646 = vpack.c.bf16 %v630, %v630
        %v647 = vpack.c.bf16 %v631, %v631
        %v648 = vpack.c.bf16 %v632, %v632
        %v649 = vpack.c.bf16 %v633, %v633
        %v650 = vpack.c.bf16 %v634, %v634
        %v651 = vpack.c.bf16 %v635, %v635
        %v652 = vpack.c.bf16 %v636, %v636
        %v653 = vunpack.c.l.bf16 %v637
        %v654 = vunpack.c.l.bf16 %v638
        %v655 = vunpack.c.l.bf16 %v639
        %v656 = vunpack.c.l.bf16 %v640
        %v657 = vunpack.c.l.bf16 %v641
        %v658 = vunpack.c.l.bf16 %v642
        %v659 = vunpack.c.l.bf16 %v643
        %v660 = vunpack.c.l.bf16 %v644
        %v661 = vunpack.c.l.bf16 %v645
        %v662 = vunpack.c.l.bf16 %v646
        %v663 = vunpack.c.l.bf16 %v647
        %v664 = vunpack.c.l.bf16 %v648
        %v665 = vunpack.c.l.bf16 %v649
        %v666 = vunpack.c.l.bf16 %v650
        %v667 = vunpack.c.l.bf16 %v651
        %v668 = vunpack.c.l.bf16 %v652
        %v669 = vsub.f32 %v621, %v653
        %v670 = vsub.f32 %v622, %v654
        %v671 = vsub.f32 %v623, %v655
        %v672 = vsub.f32 %v624, %v656
        %v673 = vsub.f32 %v625, %v657
        %v674 = vsub.f32 %v626, %v658
        %v675 = vsub.f32 %v627, %v659
        %v676 = vsub.f32 %v628, %v660
        %v677 = vsub.f32 %v629, %v661
        %v678 = vsub.f32 %v630, %v662
        %v679 = vsub.f32 %v631, %v663
        %v680 = vsub.f32 %v632, %v664
        %v681 = vsub.f32 %v633, %v665
        %v682 = vsub.f32 %v634, %v666
        %v683 = vsub.f32 %v635, %v667
        %v684 = vsub.f32 %v636, %v668
        %v685 = vpack.c.bf16 %v669, %v669
        %v686 = vpack.c.bf16 %v670, %v670
        %v687 = vpack.c.bf16 %v671, %v671
        %v688 = vpack.c.bf16 %v672, %v672
        %v689 = vpack.c.bf16 %v673, %v673
        %v690 = vpack.c.bf16 %v674, %v674
        %v691 = vpack.c.bf16 %v675, %v675
        %v692 = vpack.c.bf16 %v676, %v676
        %v693 = vpack.c.bf16 %v677, %v677
        %v694 = vpack.c.bf16 %v678, %v678
        %v695 = vpack.c.bf16 %v679, %v679
        %v696 = vpack.c.bf16 %v680, %v680
        %v697 = vpack.c.bf16 %v681, %v681
        %v698 = vpack.c.bf16 %v682, %v682
        %v699 = vpack.c.bf16 %v683, %v683
        %v700 = vpack.c.bf16 %v684, %v684
        %v701 = vunpack.c.l.bf16 %v685
        %v702 = vunpack.c.l.bf16 %v686
        %v703 = vunpack.c.l.bf16 %v687
        %v704 = vunpack.c.l.bf16 %v688
        %v705 = vunpack.c.l.bf16 %v689
        %v706 = vunpack.c.l.bf16 %v690
        %v707 = vunpack.c.l.bf16 %v691
        %v708 = vunpack.c.l.bf16 %v692
        %v709 = vunpack.c.l.bf16 %v693
        %v710 = vunpack.c.l.bf16 %v694
        %v711 = vunpack.c.l.bf16 %v695
        %v712 = vunpack.c.l.bf16 %v696
        %v713 = vunpack.c.l.bf16 %v697
        %v714 = vunpack.c.l.bf16 %v698
        %v715 = vunpack.c.l.bf16 %v699
        %v716 = vunpack.c.l.bf16 %v700
        %v717 = vsub.f32 %v669, %v701
        %v718 = vsub.f32 %v670, %v702
        %v719 = vsub.f32 %v671, %v703
        %v720 = vsub.f32 %v672, %v704
        %v721 = vsub.f32 %v673, %v705
        %v722 = vsub.f32 %v674, %v706
        %v723 = vsub.f32 %v675, %v707
        %v724 = vsub.f32 %v676, %v708
        %v725 = vsub.f32 %v677, %v709
        %v726 = vsub.f32 %v678, %v710
        %v727 = vsub.f32 %v679, %v711
        %v728 = vsub.f32 %v680, %v712
        %v729 = vsub.f32 %v681, %v713
        %v730 = vsub.f32 %v682, %v714
        %v731 = vsub.f32 %v683, %v715
        %v732 = vsub.f32 %v684, %v716
        %v733 = vpack.c.bf16 %v718, %v717
        %v734 = vpack.c.bf16 %v720, %v719
        %v735 = vpack.c.bf16 %v722, %v721
        %v736 = vpack.c.bf16 %v724, %v723
        %v737 = vpack.c.bf16 %v726, %v725
        %v738 = vpack.c.bf16 %v728, %v727
        %v739 = vpack.c.bf16 %v730, %v729
        %v740 = vpack.c.bf16 %v732, %v731
        %v741 = vadd.s32 %v295, 1
        %vm742 = vcmp.eq.s32.totalorder %v174, %v741
        %v743 = vsel %vm742, 1, 0
        %v744 = vcvt.s32.f32 %v743
        %v745 = vpack.c.bf16 %v744, %v744
        %v762 = vunpack.c.l.b16 %v637
        %v763 = vunpack.c.l.b16 %v638
        %v764 = vunpack.c.l.b16 %v639
        %v765 = vunpack.c.l.b16 %v640
        %v766 = vunpack.c.l.b16 %v641
        %v767 = vunpack.c.l.b16 %v642
        %v768 = vunpack.c.l.b16 %v643
        %v769 = vunpack.c.l.b16 %v644
        %v770 = vunpack.c.l.b16 %v645
        %v771 = vunpack.c.l.b16 %v646
        %v772 = vunpack.c.l.b16 %v647
        %v773 = vunpack.c.l.b16 %v648
        %v774 = vunpack.c.l.b16 %v649
        %v775 = vunpack.c.l.b16 %v650
        %v776 = vunpack.c.l.b16 %v651
        %v777 = vunpack.c.l.b16 %v652
        %v778 = vpack.c.b16 %v763, %v762
        %v779 = vpack.c.b16 %v765, %v764
        %v780 = vpack.c.b16 %v767, %v766
        %v781 = vpack.c.b16 %v769, %v768
        %v782 = vpack.c.b16 %v771, %v770
        %v783 = vpack.c.b16 %v773, %v772
        %v784 = vpack.c.b16 %v775, %v774
        %v785 = vpack.c.b16 %v777, %v776
        %v787 = vsel %vm340, %v778, 0
        %v790 = vsel %vm340, %v779, 0
        %v793 = vsel %vm340, %v780, 0
        %v796 = vsel %vm340, %v781, 0
        %v799 = vsel %vm340, %v782, 0
        %v802 = vsel %vm340, %v783, 0
        %v805 = vsel %vm340, %v784, 0
        %v808 = vsel %vm340, %v785, 0
        %v811 = vsel %vm365, %v745, 0
        %813 = vmatpush.bf16.msra.mxu0 0
        %814 = vmatpush.bf16.msra.mxu0 0
        %815 = vmatpush.bf16.msra.mxu0 0
        %816 = vmatpush.bf16.msra.mxu0 0
        %817 = vmatpush.bf16.msra.mxu0 0
        %818 = vmatpush.bf16.msra.mxu0 0
        %819 = vmatpush.bf16.msra.mxu0 0
        %820 = vmatpush.bf16.msra.mxu0 %v811
        %821 = vmatmul.bf16.gmra.mxu0 %v787
        %v822 = vpop.f32.mrf.mxu0
        %v823 = vadd.f32 0.0, %v822
        %v824 = vpop.f32.mrf.mxu0
        %v825 = vadd.f32 0.0, %v824
        %826 = vmatmul.bf16.gmra.mxu0 %v790
        %v827 = vpop.f32.mrf.mxu0
        %v828 = vadd.f32 0.0, %v827
        %v829 = vpop.f32.mrf.mxu0
        %v830 = vadd.f32 0.0, %v829
        %831 = vmatmul.bf16.gmra.mxu0 %v793
        %v832 = vpop.f32.mrf.mxu0
        %v833 = vadd.f32 0.0, %v832
        %v834 = vpop.f32.mrf.mxu0
        %v835 = vadd.f32 0.0, %v834
        %836 = vmatmul.bf16.gmra.mxu0 %v796
        %v837 = vpop.f32.mrf.mxu0
        %v838 = vadd.f32 0.0, %v837
        %v839 = vpop.f32.mrf.mxu0
        %v840 = vadd.f32 0.0, %v839
        %841 = vmatmul.bf16.gmra.mxu0 %v799
        %v842 = vpop.f32.mrf.mxu0
        %v843 = vadd.f32 0.0, %v842
        %v844 = vpop.f32.mrf.mxu0
        %v845 = vadd.f32 0.0, %v844
        %846 = vmatmul.bf16.gmra.mxu0 %v802
        %v847 = vpop.f32.mrf.mxu0
        %v848 = vadd.f32 0.0, %v847
        %v849 = vpop.f32.mrf.mxu0
        %v850 = vadd.f32 0.0, %v849
        %851 = vmatmul.bf16.gmra.mxu0 %v805
        %v852 = vpop.f32.mrf.mxu0
        %v853 = vadd.f32 0.0, %v852
        %v854 = vpop.f32.mrf.mxu0
        %v855 = vadd.f32 0.0, %v854
        %856 = vmatmul.bf16.gmra.mxu0 %v808
        %v857 = vpop.f32.mrf.mxu0
        %v858 = vadd.f32 0.0, %v857
        %v859 = vpop.f32.mrf.mxu0
        %v860 = vadd.f32 0.0, %v859
        %861 = vdwg.mxu0
        %v862 = vadd.f32 %v604, %v823
        %v863 = vadd.f32 %v605, %v825
        %v864 = vadd.f32 %v606, %v828
        %v865 = vadd.f32 %v607, %v830
        %v866 = vadd.f32 %v608, %v833
        %v867 = vadd.f32 %v609, %v835
        %v868 = vadd.f32 %v610, %v838
        %v869 = vadd.f32 %v611, %v840
        %v870 = vadd.f32 %v612, %v843
        %v871 = vadd.f32 %v613, %v845
        %v872 = vadd.f32 %v614, %v848
        %v873 = vadd.f32 %v615, %v850
        %v874 = vadd.f32 %v616, %v853
        %v875 = vadd.f32 %v617, %v855
        %v876 = vadd.f32 %v618, %v858
        %v877 = vadd.f32 %v619, %v860
        %v894 = vunpack.c.l.b16 %v685
        %v895 = vunpack.c.l.b16 %v686
        %v896 = vunpack.c.l.b16 %v687
        %v897 = vunpack.c.l.b16 %v688
        %v898 = vunpack.c.l.b16 %v689
        %v899 = vunpack.c.l.b16 %v690
        %v900 = vunpack.c.l.b16 %v691
        %v901 = vunpack.c.l.b16 %v692
        %v902 = vunpack.c.l.b16 %v693
        %v903 = vunpack.c.l.b16 %v694
        %v904 = vunpack.c.l.b16 %v695
        %v905 = vunpack.c.l.b16 %v696
        %v906 = vunpack.c.l.b16 %v697
        %v907 = vunpack.c.l.b16 %v698
        %v908 = vunpack.c.l.b16 %v699
        %v909 = vunpack.c.l.b16 %v700
        %v910 = vpack.c.b16 %v895, %v894
        %v911 = vpack.c.b16 %v897, %v896
        %v912 = vpack.c.b16 %v899, %v898
        %v913 = vpack.c.b16 %v901, %v900
        %v914 = vpack.c.b16 %v903, %v902
        %v915 = vpack.c.b16 %v905, %v904
        %v916 = vpack.c.b16 %v907, %v906
        %v917 = vpack.c.b16 %v909, %v908
        %v919 = vsel %vm340, %v910, 0
        %v922 = vsel %vm340, %v911, 0
        %v925 = vsel %vm340, %v912, 0
        %v928 = vsel %vm340, %v913, 0
        %v931 = vsel %vm340, %v914, 0
        %v934 = vsel %vm340, %v915, 0
        %v937 = vsel %vm340, %v916, 0
        %v940 = vsel %vm340, %v917, 0
        %942 = vmatpush.bf16.msra.mxu0 0
        %943 = vmatpush.bf16.msra.mxu0 0
        %944 = vmatpush.bf16.msra.mxu0 0
        %945 = vmatpush.bf16.msra.mxu0 0
        %946 = vmatpush.bf16.msra.mxu0 0
        %947 = vmatpush.bf16.msra.mxu0 0
        %948 = vmatpush.bf16.msra.mxu0 0
        %949 = vmatpush.bf16.msra.mxu0 %v811
        %950 = vmatmul.bf16.gmra.mxu0 %v919
        %v951 = vpop.f32.mrf.mxu0
        %v952 = vadd.f32 0.0, %v951
        %v953 = vpop.f32.mrf.mxu0
        %v954 = vadd.f32 0.0, %v953
        %955 = vmatmul.bf16.gmra.mxu0 %v922
        %v956 = vpop.f32.mrf.mxu0
        %v957 = vadd.f32 0.0, %v956
        %v958 = vpop.f32.mrf.mxu0
        %v959 = vadd.f32 0.0, %v958
        %960 = vmatmul.bf16.gmra.mxu0 %v925
        %v961 = vpop.f32.mrf.mxu0
        %v962 = vadd.f32 0.0, %v961
        %v963 = vpop.f32.mrf.mxu0
        %v964 = vadd.f32 0.0, %v963
        %965 = vmatmul.bf16.gmra.mxu0 %v928
        %v966 = vpop.f32.mrf.mxu0
        %v967 = vadd.f32 0.0, %v966
        %v968 = vpop.f32.mrf.mxu0
        %v969 = vadd.f32 0.0, %v968
        %970 = vmatmul.bf16.gmra.mxu0 %v931
        %v971 = vpop.f32.mrf.mxu0
        %v972 = vadd.f32 0.0, %v971
        %v973 = vpop.f32.mrf.mxu0
        %v974 = vadd.f32 0.0, %v973
        %975 = vmatmul.bf16.gmra.mxu0 %v934
        %v976 = vpop.f32.mrf.mxu0
        %v977 = vadd.f32 0.0, %v976
        %v978 = vpop.f32.mrf.mxu0
        %v979 = vadd.f32 0.0, %v978
        %980 = vmatmul.bf16.gmra.mxu0 %v937
        %v981 = vpop.f32.mrf.mxu0
        %v982 = vadd.f32 0.0, %v981
        %v983 = vpop.f32.mrf.mxu0
        %v984 = vadd.f32 0.0, %v983
        %985 = vmatmul.bf16.gmra.mxu0 %v940
        %v986 = vpop.f32.mrf.mxu0
        %v987 = vadd.f32 0.0, %v986
        %v988 = vpop.f32.mrf.mxu0
        %v989 = vadd.f32 0.0, %v988
        %990 = vdwg.mxu0
        %v991 = vadd.f32 %v862, %v952
        %v992 = vadd.f32 %v863, %v954
        %v993 = vadd.f32 %v864, %v957
        %v994 = vadd.f32 %v865, %v959
        %v995 = vadd.f32 %v866, %v962
        %v996 = vadd.f32 %v867, %v964
        %v997 = vadd.f32 %v868, %v967
        %v998 = vadd.f32 %v869, %v969
        %v999 = vadd.f32 %v870, %v972
        %v1000 = vadd.f32 %v871, %v974
        %v1001 = vadd.f32 %v872, %v977
        %v1002 = vadd.f32 %v873, %v979
        %v1003 = vadd.f32 %v874, %v982
        %v1004 = vadd.f32 %v875, %v984
        %v1005 = vadd.f32 %v876, %v987
        %v1006 = vadd.f32 %v877, %v989
        %v1008 = vsel %vm340, %v733, 0
        %v1011 = vsel %vm340, %v734, 0
        %v1014 = vsel %vm340, %v735, 0
        %v1017 = vsel %vm340, %v736, 0
        %v1020 = vsel %vm340, %v737, 0
        %v1023 = vsel %vm340, %v738, 0
        %v1026 = vsel %vm340, %v739, 0
        %v1029 = vsel %vm340, %v740, 0
        %1031 = vmatpush.bf16.msra.mxu0 0
        %1032 = vmatpush.bf16.msra.mxu0 0
        %1033 = vmatpush.bf16.msra.mxu0 0
        %1034 = vmatpush.bf16.msra.mxu0 0
        %1035 = vmatpush.bf16.msra.mxu0 0
        %1036 = vmatpush.bf16.msra.mxu0 0
        %1037 = vmatpush.bf16.msra.mxu0 0
        %1038 = vmatpush.bf16.msra.mxu0 %v811
        %1039 = vmatmul.bf16.gmra.mxu0 %v1008
        %v1040 = vpop.f32.mrf.mxu0
        %v1041 = vadd.f32 0.0, %v1040
        %v1042 = vpop.f32.mrf.mxu0
        %v1043 = vadd.f32 0.0, %v1042
        %1044 = vmatmul.bf16.gmra.mxu0 %v1011
        %v1045 = vpop.f32.mrf.mxu0
        %v1046 = vadd.f32 0.0, %v1045
        %v1047 = vpop.f32.mrf.mxu0
        %v1048 = vadd.f32 0.0, %v1047
        %1049 = vmatmul.bf16.gmra.mxu0 %v1014
        %v1050 = vpop.f32.mrf.mxu0
        %v1051 = vadd.f32 0.0, %v1050
        %v1052 = vpop.f32.mrf.mxu0
        %v1053 = vadd.f32 0.0, %v1052
        %1054 = vmatmul.bf16.gmra.mxu0 %v1017
        %v1055 = vpop.f32.mrf.mxu0
        %v1056 = vadd.f32 0.0, %v1055
        %v1057 = vpop.f32.mrf.mxu0
        %v1058 = vadd.f32 0.0, %v1057
        %1059 = vmatmul.bf16.gmra.mxu0 %v1020
        %v1060 = vpop.f32.mrf.mxu0
        %v1061 = vadd.f32 0.0, %v1060
        %v1062 = vpop.f32.mrf.mxu0
        %v1063 = vadd.f32 0.0, %v1062
        %1064 = vmatmul.bf16.gmra.mxu0 %v1023
        %v1065 = vpop.f32.mrf.mxu0
        %v1066 = vadd.f32 0.0, %v1065
        %v1067 = vpop.f32.mrf.mxu0
        %v1068 = vadd.f32 0.0, %v1067
        %1069 = vmatmul.bf16.gmra.mxu0 %v1026
        %v1070 = vpop.f32.mrf.mxu0
        %v1071 = vadd.f32 0.0, %v1070
        %v1072 = vpop.f32.mrf.mxu0
        %v1073 = vadd.f32 0.0, %v1072
        %1074 = vmatmul.bf16.gmra.mxu0 %v1029
        %v1075 = vpop.f32.mrf.mxu0
        %v1076 = vadd.f32 0.0, %v1075
        %v1077 = vpop.f32.mrf.mxu0
        %v1078 = vadd.f32 0.0, %v1077
        %1079 = vdwg.mxu0
        %v1080 = vadd.f32 %v991, %v1041
        %v1081 = vadd.f32 %v992, %v1043
        %v1082 = vadd.f32 %v993, %v1046
        %v1083 = vadd.f32 %v994, %v1048
        %v1084 = vadd.f32 %v995, %v1051
        %v1085 = vadd.f32 %v996, %v1053
        %v1086 = vadd.f32 %v997, %v1056
        %v1087 = vadd.f32 %v998, %v1058
        %v1088 = vadd.f32 %v999, %v1061
        %v1089 = vadd.f32 %v1000, %v1063
        %v1090 = vadd.f32 %v1001, %v1066
        %v1091 = vadd.f32 %v1002, %v1068
        %v1092 = vadd.f32 %v1003, %v1071
        %v1093 = vadd.f32 %v1004, %v1073
        %v1094 = vadd.f32 %v1005, %v1076
        %v1095 = vadd.f32 %v1006, %v1078
        %1104 = vrot.lane.b32.xlu0 %v1088, 16
        %v1105 = vpop.permute.xlu0 %1104
        %1106 = vrot.lane.b32.xlu0 %v1089, 16
        %v1107 = vpop.permute.xlu0 %1106
        %1108 = vrot.lane.b32.xlu0 %v1090, 16
        %v1109 = vpop.permute.xlu0 %1108
        %1110 = vrot.lane.b32.xlu0 %v1091, 16
        %v1111 = vpop.permute.xlu0 %1110
        %1112 = vrot.lane.b32.xlu0 %v1092, 16
        %v1113 = vpop.permute.xlu0 %1112
        %1114 = vrot.lane.b32.xlu0 %v1093, 16
        %v1115 = vpop.permute.xlu0 %1114
        %1116 = vrot.lane.b32.xlu0 %v1094, 16
        %v1117 = vpop.permute.xlu0 %1116
        %1118 = vrot.lane.b32.xlu0 %v1095, 16
        %v1119 = vpop.permute.xlu0 %1118
        %vm1128 = vcmask 130048
        %v1129 = vsel %vm1128, %v1080, %v1105
        %v1130 = vsel %vm1128, %v1081, %v1107
        %v1131 = vsel %vm1128, %v1082, %v1109
        %v1132 = vsel %vm1128, %v1083, %v1111
        %v1133 = vsel %vm1128, %v1084, %v1113
        %v1134 = vsel %vm1128, %v1085, %v1115
        %v1135 = vsel %vm1128, %v1086, %v1117
        %v1136 = vsel %vm1128, %v1087, %v1119
        %vm1137 = vcmask 261120
        %1138 = vst.msk [vmem:[%s167] sm:$0xff] %vm1137, %v1129
        %1139 = vst.msk [vmem:[%s167 + $0x8] sm:$0xff] %vm1137, %v1130
        %1140 = vst.msk [vmem:[%s167 + $0x10] sm:$0xff] %vm1137, %v1131
        %1141 = vst.msk [vmem:[%s167 + $0x18] sm:$0xff] %vm1137, %v1132
        %1142 = vst.msk [vmem:[%s167 + $0x20] sm:$0xff] %vm1137, %v1133
        %1143 = vst.msk [vmem:[%s167 + $0x28] sm:$0xff] %vm1137, %v1134
        %1144 = vst.msk [vmem:[%s167 + $0x30] sm:$0xff] %vm1137, %v1135
        %1145 = vst.msk [vmem:[%s167 + $0x38] sm:$0xff] %vm1137, %v1136
        %s1146 = sand.u32 %s79, 1
        %s1147 = scalar_lea.sflag [#allocation4], %s1146
        %s1148 = sand.u32 %s79, 1
        %s1149 = smul.addr %s1148, 64
        %s1150 = scalar_lea.vmem [#allocation5], %s1149
        // Predicated region
        $region29: #{tpu_custom_call.1} parent=23 // pred_check
          %p1151 = pneg %p89
        $region30: #{tpu_custom_call.1} parent=23 // pred_check_branch
          %1153 = sbr.rel (%p1151) target = $region32
        $region31: #{tpu_custom_call.1} parent=23 // pred_region
          %s1154 = smul.u32 8, %s24
          %1156 = vsyncadd %s1147, 0
          %s1157 = smul.addr %s1154, 2
          %s1158 = sadd.s32 %s25, %s1157
          %s1159 = smul.addr %s23, 16
          %s1160 = sadd.s32 %s1158, %s1159
          %s1161 = smul.addr %s1160, 8
          %s1162 = scalar_lea.hbm %s1, %s1161
          %s1163 = sshll.u32 %s1150, 4
          %s1164 = int_to_ptr.vmem [resolvable:$true] %s1163
          %s1165 = sshll.u32 %s1162, 4
          %s1166 = int_to_ptr.hbm [resolvable:$true] %s1165
          %1171 = dma.vmem_to_hbm [thread:$0]  %s1164, 1024, %s1166, %s1147, 128, 256, 8
        $region32: #{tpu_custom_call.1} parent=23 // pred_fallthru
          _
      $region24: #{tpu_custom_call.1} parent=5 // pred_fallthru
        _
      %p1172 = scmp.le.s32.totalorder 2, %s13
      // Predicated region
      $region33: #{tpu_custom_call.1} parent=5 // pred_check
        %p1173 = pneg %p1172
      $region34: #{tpu_custom_call.1} parent=5 // pred_check_branch
        %1175 = sbr.rel (%p1173) target = $region36
      $region35: #{tpu_custom_call.1} parent=5 // pred_region
        %s1176 = ssub.s32 %s13, 2
        // Predicated region
        $region37: #{tpu_custom_call.1} parent=35 // pred_check
          %p1177 = pneg %p95
        $region38: #{tpu_custom_call.1} parent=35 // pred_check_branch
          %1179 = sbr.rel (%p1177) target = $region40
        $region39: #{tpu_custom_call.1} parent=35 // pred_region
          %s1180 = sand.u32 %s80, 1
          %s1181 = scalar_lea.sflag [#allocation4], %s1180
          %s1182 = sand.u32 %s80, 1
          %s1183 = smul.addr %s1182, 64
          %s1184 = scalar_lea.vmem [#allocation5], %s1183
          %1186 = dma.done %s1181, 1024
        $region40: #{tpu_custom_call.1} parent=35 // pred_fallthru
          _
      $region36: #{tpu_custom_call.1} parent=5 // pred_fallthru
        _
    $region6: #{tpu_custom_call.1} parent=1 // loop_footer
      %s17 = sadd.s32 1, %s13
    $region7: #{tpu_custom_call.1} parent=1 // loop_footer_branch
      %12 = sbr.rel target = $region3
    $region8: #{tpu_custom_call.1} parent=1 // loop_exit
      _
    %1187 = vsyncpa [#allocation3], 1
    %s1188 = scalar_lea.sflag [#allocation3], 1
    %1189 = vsyncpa %s1188, 1
    %1190 = vsyncpa [#allocation4], 1
    %s1191 = scalar_lea.sflag [#allocation4], 1
    %1192 = vsyncpa %s1191, 1

</llo_original>
